<compile_context>
chip_gen: v6e
topology: v6e:2x2x1
jax: 0.10.0
libtpu: 0.0.40
codegen_flags: <defaults>
</compile_context>

<pallas_src>
import jax
import jax.numpy as jnp
from jax.experimental import pallas as pl
from jax.experimental.pallas import tpu as pltpu

_LANE = 128    # f32 lane width
_SUBLANE = 8   # f32 sublane width


def _round_up(n, m):
    return ((n + m - 1) // m) * m


def _tensorcores_per_chip():
    # v7x has 2 TensorCores per chip; v5e/v6e have 1.  Fall back to 1.
    try:
        kind = jax.devices()[0].device_kind.lower()
    except Exception:
        return 1
    return 2 if "v7" in kind else 1


def pinn_kernel(x_ref, w1_ref, b1_ref, w2_ref, b2_ref, w3_ref, b3_ref, o_ref):
    # Whole forward pass for one batch tile, fused in VMEM.
    x = x_ref[...]
    h = jnp.dot(x, w1_ref[...], preferred_element_type=jnp.float32) + b1_ref[...]
    h = jnp.maximum(h, 0.0)
    h = jnp.dot(h, w2_ref[...], preferred_element_type=jnp.float32) + b2_ref[...]
    h = jnp.maximum(h, 0.0)
    out = jnp.dot(h, w3_ref[...], preferred_element_type=jnp.float32) + b3_ref[...]
    # w3/b3 are lane-padded to 128 for a full-width MXU matmul; write back
    # only the real output columns (lane-narrow HBM store, per-tile cost).
    o_ref[...] = out[:, : o_ref.shape[-1]].astype(o_ref.dtype)


class PinnPallas:
    """Pads/caches parameters once; __call__ runs the fused Pallas forward."""

    def __init__(self, w1, b1, w2, b2, w3, b3, *, max_batch_tile=1024):
        f32 = jnp.float32
        in_dim, h1 = w1.shape
        h2 = w2.shape[1]
        out_dim = w3.shape[1]

        h1_p = _round_up(h1, _LANE)
        h2_p = _round_up(h2, _LANE)
        out_p = _round_up(out_dim, _LANE)

        # Hoisted, one-time padding (zero rows/cols are semantics-preserving).
        w1_p = jnp.zeros((in_dim, h1_p), f32).at[:, :h1].set(w1.astype(f32))
        b1_p = jnp.zeros((1, h1_p), f32).at[:, :h1].set(
            b1.reshape(1, h1).astype(f32))
        w2_p = jnp.zeros((h1_p, h2_p), f32).at[:h1, :h2].set(w2.astype(f32))
        b2_p = jnp.zeros((1, h2_p), f32).at[:, :h2].set(
            b2.reshape(1, h2).astype(f32))
        w3_p = jnp.zeros((h2_p, out_p), f32).at[:h2, :out_dim].set(w3.astype(f32))
        b3_p = jnp.zeros((1, out_p), f32).at[:, :out_dim].set(
            b3.reshape(1, out_dim).astype(f32))

        self.in_dim = in_dim
        self.out_dim = out_dim
        self.max_batch_tile = max_batch_tile
        self.params = (w1_p, b1_p, w2_p, b2_p, w3_p, b3_p)
        self.num_tc = _tensorcores_per_chip()

    def __call__(self, x):
        orig_dtype = x.dtype
        f32 = jnp.float32
        B, in_dim = x.shape
        assert in_dim == self.in_dim

        # Chip-aware batch tiling.
        B8 = _round_up(B, _SUBLANE)
        if self.num_tc >= 2 and B8 >= 2 * _SUBLANE:
            # v7x: balanced >=2-way split so both TensorCores are busy.
            tile = min(self.max_batch_tile,
                       _round_up(pl.cdiv(B8, 2), _SUBLANE))
        else:
            # v5e/v6e: single TC -> one big tile when it fits (grid is a
            # sequential loop; extra steps are pure per-step overhead).
            tile = min(self.max_batch_tile, B8)
        B_p = _round_up(B8, tile)
        grid = (B_p // tile,)

        # Only per-call work on x: dtype cast + (rare) batch-row padding.
        x_in = x.astype(f32)
        if B_p != B:
            x_in = jnp.zeros((B_p, in_dim), f32).at[:B].set(x_in)

        w1_p, b1_p, w2_p, b2_p, w3_p, b3_p = self.params

        out = pl.pallas_call(
            pinn_kernel,
            out_shape=jax.ShapeDtypeStruct((B_p, self.out_dim), f32),
            grid=grid,
            in_specs=[
                # Batch tile of x at its real (unpadded) lane width.
                pl.BlockSpec((tile, in_dim), lambda i: (i, 0)),
                # Full weights / biases, resident across all grid steps.
                pl.BlockSpec(w1_p.shape, lambda i: (0, 0)),
                pl.BlockSpec(b1_p.shape, lambda i: (0, 0)),
                pl.BlockSpec(w2_p.shape, lambda i: (0, 0)),
                pl.BlockSpec(b2_p.shape, lambda i: (0, 0)),
                pl.BlockSpec(w3_p.shape, lambda i: (0, 0)),
                pl.BlockSpec(b3_p.shape, lambda i: (0, 0)),
            ],
            out_specs=pl.BlockSpec((tile, self.out_dim), lambda i: (i, 0)),
            compiler_params=pltpu.CompilerParams(
                dimension_semantics=("parallel",),
            ),
        )(x_in, w1_p, b1_p, w2_p, b2_p, w3_p, b3_p)

        return out[:B].astype(orig_dtype)


def _init_linear(key, in_features, out_features, dtype=jnp.float32):
    # Deterministic init mimicking nn.Linear's uniform(-1/sqrt(in), 1/sqrt(in)).
    kw, kb = jax.random.split(key)
    bound = 1.0 / jnp.sqrt(jnp.asarray(in_features, dtype))
    w = jax.random.uniform(kw, (in_features, out_features), dtype, -bound, bound)
    b = jax.random.uniform(kb, (1, out_features), dtype, -bound, bound)
    return w, b


if __name__ == "__main__":
    key = jax.random.PRNGKey(0)
    k_x, k1, k2, k3 = jax.random.split(key, 4)

    # Small shapes consistent with the module: PINN(input_size=4, hidden1=32,
    # hidden2=32, output_size=1), batch of 16 collocation points.
    batch, input_size, hidden1, hidden2, output_size = 16, 4, 32, 32, 1

    x = jax.random.normal(k_x, (batch, input_size), jnp.float32)
    w1, b1 = _init_linear(k1, input_size, hidden1)
    w2, b2 = _init_linear(k2, hidden1, hidden2)
    w3, b3 = _init_linear(k3, hidden2, output_size)

    model = PinnPallas(w1, b1, w2, b2, w3, b3)
    out = model(x)
    out = jax.block_until_ready(out)

    # Reference in plain JAX to sanity-check kernel semantics (incl. padding).
    ref = jnp.maximum(x @ w1 + b1, 0.0)
    ref = jnp.maximum(ref @ w2 + b2, 0.0)
    ref = ref @ w3 + b3

    assert out.shape == (batch, output_size)
    assert jnp.allclose(out, ref, atol=1e-5, rtol=1e-5)

    print("KERNEL_OK")
</pallas_src>

<mosaic_0001>
module attributes {stable_mosaic.version = 11 : i64} {
  func.func @pinn_kernel(%arg0: i32, %arg1: memref<16x4xf32, #tpu.memory_space<vmem>>, %arg2: memref<4x128xf32, #tpu.memory_space<vmem>>, %arg3: memref<1x128xf32, #tpu.memory_space<vmem>>, %arg4: memref<128x128xf32, #tpu.memory_space<vmem>>, %arg5: memref<1x128xf32, #tpu.memory_space<vmem>>, %arg6: memref<128x128xf32, #tpu.memory_space<vmem>>, %arg7: memref<1x128xf32, #tpu.memory_space<vmem>>, %arg8: memref<16x1xf32, #tpu.memory_space<vmem>>) attributes {dimension_semantics = [#tpu.dimension_semantics<parallel>], iteration_bounds = array<i64: 1>, scalar_prefetch = 0 : i64, scratch_operands = 0 : i64, tpu.core_type = #tpu.core_type<tc>, window_params = [{transform_indices = @transform_0, window_bounds = array<i64: 16, 4>}, {pipeline_mode = #tpu.pipeline_mode<synchronous>, transform_indices = @transform_1, window_bounds = array<i64: 4, 128>}, {pipeline_mode = #tpu.pipeline_mode<synchronous>, transform_indices = @transform_2, window_bounds = array<i64: 1, 128>}, {pipeline_mode = #tpu.pipeline_mode<synchronous>, transform_indices = @transform_3, window_bounds = array<i64: 128, 128>}, {pipeline_mode = #tpu.pipeline_mode<synchronous>, transform_indices = @transform_4, window_bounds = array<i64: 1, 128>}, {pipeline_mode = #tpu.pipeline_mode<synchronous>, transform_indices = @transform_5, window_bounds = array<i64: 128, 128>}, {pipeline_mode = #tpu.pipeline_mode<synchronous>, transform_indices = @transform_6, window_bounds = array<i64: 1, 128>}, {transform_indices = @transform_7, window_bounds = array<i64: 16, 1>}]} {
    %c0 = arith.constant 0 : index
    %c0_0 = arith.constant 0 : index
    %0 = vector.load %arg1[%c0, %c0_0] : memref<16x4xf32, #tpu.memory_space<vmem>>, vector<16x4xf32>
    %c0_1 = arith.constant 0 : index
    %c0_2 = arith.constant 0 : index
    %1 = vector.load %arg2[%c0_1, %c0_2] : memref<4x128xf32, #tpu.memory_space<vmem>>, vector<4x128xf32>
    %cst = arith.constant dense<0.000000e+00> : vector<16x128xf32>
    %2 = tpu.matmul %0, %1, %cst {dimension_numbers = #tpu.dot_dimension_numbers<[1], [0], [0], [1], [0, 0, 1, 1], [], []>} : vector<16x4xf32>, vector<4x128xf32>, vector<16x128xf32> -> vector<16x128xf32>
    %c0_3 = arith.constant 0 : index
    %c0_4 = arith.constant 0 : index
    %3 = vector.load %arg3[%c0_3, %c0_4] : memref<1x128xf32, #tpu.memory_space<vmem>>, vector<1x128xf32>
    %4 = vector.broadcast %3 : vector<1x128xf32> to vector<16x128xf32>
    %5 = arith.addf %2, %4 : vector<16x128xf32>
    %cst_5 = arith.constant 0.000000e+00 : f32
    %6 = vector.broadcast %cst_5 : f32 to vector<16x128xf32>
    %7 = arith.maximumf %5, %6 : vector<16x128xf32>
    %c0_6 = arith.constant 0 : index
    %c0_7 = arith.constant 0 : index
    %8 = vector.load %arg4[%c0_6, %c0_7] : memref<128x128xf32, #tpu.memory_space<vmem>>, vector<128x128xf32>
    %cst_8 = arith.constant dense<0.000000e+00> : vector<16x128xf32>
    %9 = tpu.matmul %7, %8, %cst_8 {dimension_numbers = #tpu.dot_dimension_numbers<[1], [0], [0], [1], [0, 0, 1, 1], [], []>} : vector<16x128xf32>, vector<128x128xf32>, vector<16x128xf32> -> vector<16x128xf32>
    %c0_9 = arith.constant 0 : index
    %c0_10 = arith.constant 0 : index
    %10 = vector.load %arg5[%c0_9, %c0_10] : memref<1x128xf32, #tpu.memory_space<vmem>>, vector<1x128xf32>
    %11 = vector.broadcast %10 : vector<1x128xf32> to vector<16x128xf32>
    %12 = arith.addf %9, %11 : vector<16x128xf32>
    %cst_11 = arith.constant 0.000000e+00 : f32
    %13 = vector.broadcast %cst_11 : f32 to vector<16x128xf32>
    %14 = arith.maximumf %12, %13 : vector<16x128xf32>
    %c0_12 = arith.constant 0 : index
    %c0_13 = arith.constant 0 : index
    %15 = vector.load %arg6[%c0_12, %c0_13] : memref<128x128xf32, #tpu.memory_space<vmem>>, vector<128x128xf32>
    %cst_14 = arith.constant dense<0.000000e+00> : vector<16x128xf32>
    %16 = tpu.matmul %14, %15, %cst_14 {dimension_numbers = #tpu.dot_dimension_numbers<[1], [0], [0], [1], [0, 0, 1, 1], [], []>} : vector<16x128xf32>, vector<128x128xf32>, vector<16x128xf32> -> vector<16x128xf32>
    %c0_15 = arith.constant 0 : index
    %c0_16 = arith.constant 0 : index
    %17 = vector.load %arg7[%c0_15, %c0_16] : memref<1x128xf32, #tpu.memory_space<vmem>>, vector<1x128xf32>
    %18 = vector.broadcast %17 : vector<1x128xf32> to vector<16x128xf32>
    %19 = arith.addf %16, %18 : vector<16x128xf32>
    %20 = vector.extract_strided_slice %19 {offsets = [0, 0], sizes = [16, 1], strides = [1, 1]} : vector<16x128xf32> to vector<16x1xf32>
    %c0_17 = arith.constant 0 : index
    %c0_18 = arith.constant 0 : index
    %21 = vector.load %arg8[%c0_17, %c0_18] : memref<16x1xf32, #tpu.memory_space<vmem>>, vector<16x1xf32>
    tpu.vector_store %arg8[%c0_17, %c0_18], %20 {strides = array<i32>} : memref<16x1xf32, #tpu.memory_space<vmem>>, vector<16x1xf32>,
    return
  }
  func.func @transform_0(%arg0: i32) -> (i32, i32) {
    %c0_i32 = arith.constant 0 : i32
    %c0_i32_0 = arith.constant 0 : i32
    return %arg0, %c0_i32 : i32, i32
  }
  func.func @transform_1(%arg0: i32) -> (i32, i32) {
    %c0_i32 = arith.constant 0 : i32
    %c0_i32_0 = arith.constant 0 : i32
    %c0_i32_1 = arith.constant 0 : i32
    return %c0_i32, %c0_i32_0 : i32, i32
  }
  func.func @transform_2(%arg0: i32) -> (i32, i32) {
    %c0_i32 = arith.constant 0 : i32
    %c0_i32_0 = arith.constant 0 : i32
    %c0_i32_1 = arith.constant 0 : i32
    return %c0_i32, %c0_i32_0 : i32, i32
  }
  func.func @transform_3(%arg0: i32) -> (i32, i32) {
    %c0_i32 = arith.constant 0 : i32
    %c0_i32_0 = arith.constant 0 : i32
    %c0_i32_1 = arith.constant 0 : i32
    return %c0_i32, %c0_i32_0 : i32, i32
  }
  func.func @transform_4(%arg0: i32) -> (i32, i32) {
    %c0_i32 = arith.constant 0 : i32
    %c0_i32_0 = arith.constant 0 : i32
    %c0_i32_1 = arith.constant 0 : i32
    return %c0_i32, %c0_i32_0 : i32, i32
  }
  func.func @transform_5(%arg0: i32) -> (i32, i32) {
    %c0_i32 = arith.constant 0 : i32
    %c0_i32_0 = arith.constant 0 : i32
    %c0_i32_1 = arith.constant 0 : i32
    return %c0_i32, %c0_i32_0 : i32, i32
  }
  func.func @transform_6(%arg0: i32) -> (i32, i32) {
    %c0_i32 = arith.constant 0 : i32
    %c0_i32_0 = arith.constant 0 : i32
    %c0_i32_1 = arith.constant 0 : i32
    return %c0_i32, %c0_i32_0 : i32, i32
  }
  func.func @transform_7(%arg0: i32) -> (i32, i32) {
    %c0_i32 = arith.constant 0 : i32
    %c0_i32_0 = arith.constant 0 : i32
    return %arg0, %c0_i32 : i32, i32
  }
}

</mosaic_0001>

<llo_original>
// kernel: tpu_custom_call.1
$region0: #{tpu_custom_call.1}
  #allocation0 [shape = 'u32[]', space=smem, size = 0x4, offset = 0x4, fixed_abs, tag = 'smem constant byte address 0x4 - core index']
  #allocation1 [shape = 'u32[144,128]{1,0:T(1,128)}', space=vmem, size = 0x12000, scoped, tag = 'internal scratch']
  %s0 = inlined_call_operand.vmem [shape: f32[16,4], index: 0, kind: input, shape index: {}]
  %s1 = inlined_call_operand.vmem [shape: f32[4,128], index: 1, kind: input, shape index: {}]
  %s2 = inlined_call_operand.vmem [shape: f32[1,128], index: 2, kind: input, shape index: {}]
  %s3 = inlined_call_operand.hbm [shape: f32[128,128], index: 3, kind: input, shape index: {}]
  %s4 = inlined_call_operand.vmem [shape: f32[1,128], index: 4, kind: input, shape index: {}]
  %s5 = inlined_call_operand.hbm [shape: f32[128,128], index: 5, kind: input, shape index: {}]
  %s6 = inlined_call_operand.vmem [shape: f32[1,128], index: 6, kind: input, shape index: {}]
  %s7 = inlined_call_operand.vmem [shape: f32[16,1], index: 7, kind: output, shape index: {}]
  %s8 = sld [smem:[#allocation0]]
  $region46: #{tpu_custom_call.1} parent=0
    _
  %s10 = ssub.s32 1, %s8
  %s11 = scalar_select 0, %s10, %s8
  $region1: #{tpu_custom_call.1} parent=0
    #allocation2 [shape = 'u8[65536]{0}', space=vmem, size = 0x10000, scoped, tag = 'input window, operand 3, single buffered']
    #allocation3 [shape = 's32[1]{0}', space=sflag, size = 0x4, scoped, tag = 'scoped memory for tpu_custom_call.1']
    #allocation4 [shape = 'u8[65536]{0}', space=vmem, size = 0x10000, scoped, tag = 'input window, operand 5, single buffered']
    #allocation5 [shape = 's32[1]{0}', space=sflag, size = 0x4, scoped, tag = 'scoped memory for tpu_custom_call.1']
    %12 = vsyncpa [#allocation3], 0
    %13 = vsyncpa [#allocation5], 0
    // Predicated region
    $region2: #{tpu_custom_call.1} parent=1 // pred_check
      _
    $region3: #{tpu_custom_call.1} parent=1 // pred_check_branch
      %15 = sbr.rel (0) target = $region5
    $region4: #{tpu_custom_call.1} parent=1 // pred_region
      _
    $region5: #{tpu_custom_call.1} parent=1 // pred_fallthru
      _
    // Predicated region
    $region6: #{tpu_custom_call.1} parent=1 // pred_check
      _
    $region7: #{tpu_custom_call.1} parent=1 // pred_check_branch
      %17 = sbr.rel (0) target = $region9
    $region8: #{tpu_custom_call.1} parent=1 // pred_region
      _
    $region9: #{tpu_custom_call.1} parent=1 // pred_fallthru
      _
    // Predicated region
    $region10: #{tpu_custom_call.1} parent=1 // pred_check
      _
    $region11: #{tpu_custom_call.1} parent=1 // pred_check_branch
      %19 = sbr.rel (0) target = $region13
    $region12: #{tpu_custom_call.1} parent=1 // pred_region
      _
    $region13: #{tpu_custom_call.1} parent=1 // pred_fallthru
      _
    // Predicated region
    $region14: #{tpu_custom_call.1} parent=1 // pred_check
      _
    $region15: #{tpu_custom_call.1} parent=1 // pred_check_branch
      %21 = sbr.rel (0) target = $region17
    $region16: #{tpu_custom_call.1} parent=1 // pred_region
      %s23 = ssub.s32 2048, 2048
      %24 = vsyncadd [#allocation3], %s23
      %s25 = sshll.u32 [#allocation2], 4
      %s26 = int_to_ptr.vmem [resolvable:$true] %s25
      %31 = dma.hbm_to_vmem [thread:$0]  %s3, 2048, %s26, [#allocation3], 128, 128, 8
    $region17: #{tpu_custom_call.1} parent=1 // pred_fallthru
      _
    // Predicated region
    $region18: #{tpu_custom_call.1} parent=1 // pred_check
      _
    $region19: #{tpu_custom_call.1} parent=1 // pred_check_branch
      %33 = sbr.rel (0) target = $region21
    $region20: #{tpu_custom_call.1} parent=1 // pred_region
      _
    $region21: #{tpu_custom_call.1} parent=1 // pred_fallthru
      _
    // Predicated region
    $region22: #{tpu_custom_call.1} parent=1 // pred_check
      _
    $region23: #{tpu_custom_call.1} parent=1 // pred_check_branch
      %35 = sbr.rel (0) target = $region25
    $region24: #{tpu_custom_call.1} parent=1 // pred_region
      %s37 = ssub.s32 2048, 2048
      %38 = vsyncadd [#allocation5], %s37
      %s39 = sshll.u32 [#allocation4], 4
      %s40 = int_to_ptr.vmem [resolvable:$true] %s39
      %45 = dma.hbm_to_vmem [thread:$0]  %s5, 2048, %s40, [#allocation5], 128, 128, 8
    $region25: #{tpu_custom_call.1} parent=1 // pred_fallthru
      _
    // Predicated region
    $region26: #{tpu_custom_call.1} parent=1 // pred_check
      _
    $region27: #{tpu_custom_call.1} parent=1 // pred_check_branch
      %47 = sbr.rel (0) target = $region29
    $region28: #{tpu_custom_call.1} parent=1 // pred_region
      _
    $region29: #{tpu_custom_call.1} parent=1 // pred_fallthru
      _
    // Predicated region
    $region30: #{tpu_custom_call.1} parent=1 // pred_check
      _
    $region31: #{tpu_custom_call.1} parent=1 // pred_check_branch
      %49 = sbr.rel (0) target = $region33
    $region32: #{tpu_custom_call.1} parent=1 // pred_region
      %50 = dma.done [#allocation3], 2048
    $region33: #{tpu_custom_call.1} parent=1 // pred_fallthru
      _
    // Predicated region
    $region34: #{tpu_custom_call.1} parent=1 // pred_check
      _
    $region35: #{tpu_custom_call.1} parent=1 // pred_check_branch
      %52 = sbr.rel (0) target = $region37
    $region36: #{tpu_custom_call.1} parent=1 // pred_region
      %53 = dma.done [#allocation5], 2048
    $region37: #{tpu_custom_call.1} parent=1 // pred_fallthru
      _
    %v54 = vld [vmem:[%s0] sm:$0xff]
    %v55 = vld [vmem:[%s0 + $0x8] sm:$0xff]
    %v56 = vld [vmem:[%s1] sm:$0xf]
    %v57 = vld [vmem:[%s2] sm:$0x1]
    %v59 = vlaneseq
    %v60 = vshrl.u32 %v59, 7
    %v61 = vsub.s32 0, %v60
    %v62 = vrot.slane %v57, %v61
    %vm64 = vcmask 31744
    %v66 = vsel %vm64, %v54, 0
    %v69 = vsel %vm64, %v55, 0
    %vm71 = vcmask 1043456
    %v73 = vsel %vm71, %v56, 0
    %75 = vmatprep.subr.mxu0 0.0
    %76 = vmatpush1.msra.mxu0 0.0
    %77 = vmatprep.subr.mxu0 0.0
    %78 = vmatpush1.msra.mxu0 0.0
    %79 = vmatprep.subr.mxu0 0.0
    %80 = vmatpush1.msra.mxu0 0.0
    %81 = vmatprep.subr.mxu0 0.0
    %82 = vmatpush1.msra.mxu0 0.0
    %83 = vmatprep.subr.mxu0 0.0
    %84 = vmatpush1.msra.mxu0 0.0
    %85 = vmatprep.subr.mxu0 0.0
    %86 = vmatpush1.msra.mxu0 0.0
    %87 = vmatprep.subr.mxu0 0.0
    %88 = vmatpush1.msra.mxu0 0.0
    %89 = vmatprep.subr.mxu0 0.0
    %90 = vmatpush1.msra.mxu0 0.0
    %91 = vmatprep.subr.mxu0 0.0
    %92 = vmatpush1.msra.mxu0 0.0
    %93 = vmatprep.subr.mxu0 0.0
    %94 = vmatpush1.msra.mxu0 0.0
    %95 = vmatprep.subr.mxu0 0.0
    %96 = vmatpush1.msra.mxu0 0.0
    %97 = vmatprep.subr.mxu0 0.0
    %98 = vmatpush1.msra.mxu0 0.0
    %99 = vmatprep.subr.mxu0 0.0
    %100 = vmatpush1.msra.mxu0 0.0
    %101 = vmatprep.subr.mxu0 0.0
    %102 = vmatpush1.msra.mxu0 0.0
    %103 = vmatprep.subr.mxu0 0.0
    %104 = vmatpush1.msra.mxu0 0.0
    %105 = vmatprep.subr.mxu0 0.0
    %106 = vmatpush1.msra.mxu0 %v73
    %107 = vmatprep.subr.mxu0 0.0
    %108 = vmatpush2.msra.mxu0 0.0
    %109 = vmatprep.subr.mxu0 0.0
    %110 = vmatpush2.msra.mxu0 0.0
    %111 = vmatprep.subr.mxu0 0.0
    %112 = vmatpush2.msra.mxu0 0.0
    %113 = vmatprep.subr.mxu0 0.0
    %114 = vmatpush2.msra.mxu0 0.0
    %115 = vmatprep.subr.mxu0 0.0
    %116 = vmatpush2.msra.mxu0 0.0
    %117 = vmatprep.subr.mxu0 0.0
    %118 = vmatpush2.msra.mxu0 0.0
    %119 = vmatprep.subr.mxu0 0.0
    %120 = vmatpush2.msra.mxu0 0.0
    %121 = vmatprep.subr.mxu0 0.0
    %122 = vmatpush2.msra.mxu0 0.0
    %123 = vmatprep.subr.mxu0 0.0
    %124 = vmatpush2.msra.mxu0 0.0
    %125 = vmatprep.subr.mxu0 0.0
    %126 = vmatpush2.msra.mxu0 0.0
    %127 = vmatprep.subr.mxu0 0.0
    %128 = vmatpush2.msra.mxu0 0.0
    %129 = vmatprep.subr.mxu0 0.0
    %130 = vmatpush2.msra.mxu0 0.0
    %131 = vmatprep.subr.mxu0 0.0
    %132 = vmatpush2.msra.mxu0 0.0
    %133 = vmatprep.subr.mxu0 0.0
    %134 = vmatpush2.msra.mxu0 0.0
    %135 = vmatprep.subr.mxu0 0.0
    %136 = vmatpush2.msra.mxu0 0.0
    %137 = vmatprep.subr.mxu0 0.0
    %138 = vmatpush2.msra.mxu0 0.0
    %139 = vmatprep.mubr.f32.mxu0 0.0
    %140 = vmatmul.mubr.f32.gmra.mxu0 %v66
    %v141 = vpop.f32.mrf.mxu0
    %v142 = vadd.f32 %v62, %v141
    %v143 = vpop.f32.mrf.mxu0
    %144 = vmatprep.mubr.f32.mxu0 0.0
    %145 = vmatmul.mubr.f32.gmra.mxu0 %v69
    %v146 = vpop.f32.mrf.mxu0
    %v147 = vadd.f32 %v62, %v146
    %v148 = vpop.f32.mrf.mxu0
    %149 = vdwg.mxu0
    %v150 = vmax.f32 %v142, 0.0
    %v151 = vmax.f32 %v147, 0.0
    %v152 = vld [vmem:[#allocation2] sm:$0xff]
    %v153 = vld [vmem:[#allocation2 + $0x8] sm:$0xff]
    %v154 = vld [vmem:[#allocation2 + $0x10] sm:$0xff]
    %v155 = vld [vmem:[#allocation2 + $0x18] sm:$0xff]
    %v156 = vld [vmem:[#allocation2 + $0x20] sm:$0xff]
    %v157 = vld [vmem:[#allocation2 + $0x28] sm:$0xff]
    %v158 = vld [vmem:[#allocation2 + $0x30] sm:$0xff]
    %v159 = vld [vmem:[#allocation2 + $0x38] sm:$0xff]
    %v160 = vld [vmem:[#allocation2 + $0x40] sm:$0xff]
    %v161 = vld [vmem:[#allocation2 + $0x48] sm:$0xff]
    %v162 = vld [vmem:[#allocation2 + $0x50] sm:$0xff]
    %v163 = vld [vmem:[#allocation2 + $0x58] sm:$0xff]
    %v164 = vld [vmem:[#allocation2 + $0x60] sm:$0xff]
    %v165 = vld [vmem:[#allocation2 + $0x68] sm:$0xff]
    %v166 = vld [vmem:[#allocation2 + $0x70] sm:$0xff]
    %v167 = vld [vmem:[#allocation2 + $0x78] sm:$0xff]
    %v168 = vld [vmem:[%s4] sm:$0x1]
    %v170 = vlaneseq
    %v171 = vshrl.u32 %v170, 7
    %v172 = vsub.s32 0, %v171
    %v173 = vrot.slane %v168, %v172
    %175 = vmatprep.subr.mxu0 0.0
    %176 = vmatpush1.msra.mxu0 %v167
    %177 = vmatprep.subr.mxu0 0.0
    %178 = vmatpush1.msra.mxu0 %v166
    %179 = vmatprep.subr.mxu0 0.0
    %180 = vmatpush1.msra.mxu0 %v165
    %181 = vmatprep.subr.mxu0 0.0
    %182 = vmatpush1.msra.mxu0 %v164
    %183 = vmatprep.subr.mxu0 0.0
    %184 = vmatpush1.msra.mxu0 %v163
    %185 = vmatprep.subr.mxu0 0.0
    %186 = vmatpush1.msra.mxu0 %v162
    %187 = vmatprep.subr.mxu0 0.0
    %188 = vmatpush1.msra.mxu0 %v161
    %189 = vmatprep.subr.mxu0 0.0
    %190 = vmatpush1.msra.mxu0 %v160
    %191 = vmatprep.subr.mxu0 0.0
    %192 = vmatpush1.msra.mxu0 %v159
    %193 = vmatprep.subr.mxu0 0.0
    %194 = vmatpush1.msra.mxu0 %v158
    %195 = vmatprep.subr.mxu0 0.0
    %196 = vmatpush1.msra.mxu0 %v157
    %197 = vmatprep.subr.mxu0 0.0
    %198 = vmatpush1.msra.mxu0 %v156
    %199 = vmatprep.subr.mxu0 0.0
    %200 = vmatpush1.msra.mxu0 %v155
    %201 = vmatprep.subr.mxu0 0.0
    %202 = vmatpush1.msra.mxu0 %v154
    %203 = vmatprep.subr.mxu0 0.0
    %204 = vmatpush1.msra.mxu0 %v153
    %205 = vmatprep.subr.mxu0 0.0
    %206 = vmatpush1.msra.mxu0 %v152
    %207 = vmatprep.subr.mxu0 0.0
    %208 = vmatpush2.msra.mxu0 0.0
    %209 = vmatprep.subr.mxu0 0.0
    %210 = vmatpush2.msra.mxu0 0.0
    %211 = vmatprep.subr.mxu0 0.0
    %212 = vmatpush2.msra.mxu0 0.0
    %213 = vmatprep.subr.mxu0 0.0
    %214 = vmatpush2.msra.mxu0 0.0
    %215 = vmatprep.subr.mxu0 0.0
    %216 = vmatpush2.msra.mxu0 0.0
    %217 = vmatprep.subr.mxu0 0.0
    %218 = vmatpush2.msra.mxu0 0.0
    %219 = vmatprep.subr.mxu0 0.0
    %220 = vmatpush2.msra.mxu0 0.0
    %221 = vmatprep.subr.mxu0 0.0
    %222 = vmatpush2.msra.mxu0 0.0
    %223 = vmatprep.subr.mxu0 0.0
    %224 = vmatpush2.msra.mxu0 0.0
    %225 = vmatprep.subr.mxu0 0.0
    %226 = vmatpush2.msra.mxu0 0.0
    %227 = vmatprep.subr.mxu0 0.0
    %228 = vmatpush2.msra.mxu0 0.0
    %229 = vmatprep.subr.mxu0 0.0
    %230 = vmatpush2.msra.mxu0 0.0
    %231 = vmatprep.subr.mxu0 0.0
    %232 = vmatpush2.msra.mxu0 0.0
    %233 = vmatprep.subr.mxu0 0.0
    %234 = vmatpush2.msra.mxu0 0.0
    %235 = vmatprep.subr.mxu0 0.0
    %236 = vmatpush2.msra.mxu0 0.0
    %237 = vmatprep.subr.mxu0 0.0
    %238 = vmatpush2.msra.mxu0 0.0
    %239 = vmatprep.mubr.f32.mxu0 0.0
    %240 = vmatmul.mubr.f32.gmra.mxu0 %v150
    %v241 = vpop.f32.mrf.mxu0
    %v242 = vadd.f32 %v173, %v241
    %v243 = vpop.f32.mrf.mxu0
    %244 = vmatprep.mubr.f32.mxu0 0.0
    %245 = vmatmul.mubr.f32.gmra.mxu0 %v151
    %v246 = vpop.f32.mrf.mxu0
    %v247 = vadd.f32 %v173, %v246
    %v248 = vpop.f32.mrf.mxu0
    %249 = vdwg.mxu0
    %v250 = vmax.f32 %v242, 0.0
    %v251 = vmax.f32 %v247, 0.0
    %v252 = vld [vmem:[#allocation4] sm:$0xff]
    %v253 = vld [vmem:[#allocation4 + $0x8] sm:$0xff]
    %v254 = vld [vmem:[#allocation4 + $0x10] sm:$0xff]
    %v255 = vld [vmem:[#allocation4 + $0x18] sm:$0xff]
    %v256 = vld [vmem:[#allocation4 + $0x20] sm:$0xff]
    %v257 = vld [vmem:[#allocation4 + $0x28] sm:$0xff]
    %v258 = vld [vmem:[#allocation4 + $0x30] sm:$0xff]
    %v259 = vld [vmem:[#allocation4 + $0x38] sm:$0xff]
    %v260 = vld [vmem:[#allocation4 + $0x40] sm:$0xff]
    %v261 = vld [vmem:[#allocation4 + $0x48] sm:$0xff]
    %v262 = vld [vmem:[#allocation4 + $0x50] sm:$0xff]
    %v263 = vld [vmem:[#allocation4 + $0x58] sm:$0xff]
    %v264 = vld [vmem:[#allocation4 + $0x60] sm:$0xff]
    %v265 = vld [vmem:[#allocation4 + $0x68] sm:$0xff]
    %v266 = vld [vmem:[#allocation4 + $0x70] sm:$0xff]
    %v267 = vld [vmem:[#allocation4 + $0x78] sm:$0xff]
    %v268 = vld [vmem:[%s6] sm:$0x1]
    %v270 = vlaneseq
    %v271 = vshrl.u32 %v270, 7
    %v272 = vsub.s32 0, %v271
    %v273 = vrot.slane %v268, %v272
    %275 = vmatprep.subr.mxu0 0.0
    %276 = vmatpush1.msra.mxu0 %v267
    %277 = vmatprep.subr.mxu0 0.0
    %278 = vmatpush1.msra.mxu0 %v266
    %279 = vmatprep.subr.mxu0 0.0
    %280 = vmatpush1.msra.mxu0 %v265
    %281 = vmatprep.subr.mxu0 0.0
    %282 = vmatpush1.msra.mxu0 %v264
    %283 = vmatprep.subr.mxu0 0.0
    %284 = vmatpush1.msra.mxu0 %v263
    %285 = vmatprep.subr.mxu0 0.0
    %286 = vmatpush1.msra.mxu0 %v262
    %287 = vmatprep.subr.mxu0 0.0
    %288 = vmatpush1.msra.mxu0 %v261
    %289 = vmatprep.subr.mxu0 0.0
    %290 = vmatpush1.msra.mxu0 %v260
    %291 = vmatprep.subr.mxu0 0.0
    %292 = vmatpush1.msra.mxu0 %v259
    %293 = vmatprep.subr.mxu0 0.0
    %294 = vmatpush1.msra.mxu0 %v258
    %295 = vmatprep.subr.mxu0 0.0
    %296 = vmatpush1.msra.mxu0 %v257
    %297 = vmatprep.subr.mxu0 0.0
    %298 = vmatpush1.msra.mxu0 %v256
    %299 = vmatprep.subr.mxu0 0.0
    %300 = vmatpush1.msra.mxu0 %v255
    %301 = vmatprep.subr.mxu0 0.0
    %302 = vmatpush1.msra.mxu0 %v254
    %303 = vmatprep.subr.mxu0 0.0
    %304 = vmatpush1.msra.mxu0 %v253
    %305 = vmatprep.subr.mxu0 0.0
    %306 = vmatpush1.msra.mxu0 %v252
    %307 = vmatprep.subr.mxu0 0.0
    %308 = vmatpush2.msra.mxu0 0.0
    %309 = vmatprep.subr.mxu0 0.0
    %310 = vmatpush2.msra.mxu0 0.0
    %311 = vmatprep.subr.mxu0 0.0
    %312 = vmatpush2.msra.mxu0 0.0
    %313 = vmatprep.subr.mxu0 0.0
    %314 = vmatpush2.msra.mxu0 0.0
    %315 = vmatprep.subr.mxu0 0.0
    %316 = vmatpush2.msra.mxu0 0.0
    %317 = vmatprep.subr.mxu0 0.0
    %318 = vmatpush2.msra.mxu0 0.0
    %319 = vmatprep.subr.mxu0 0.0
    %320 = vmatpush2.msra.mxu0 0.0
    %321 = vmatprep.subr.mxu0 0.0
    %322 = vmatpush2.msra.mxu0 0.0
    %323 = vmatprep.subr.mxu0 0.0
    %324 = vmatpush2.msra.mxu0 0.0
    %325 = vmatprep.subr.mxu0 0.0
    %326 = vmatpush2.msra.mxu0 0.0
    %327 = vmatprep.subr.mxu0 0.0
    %328 = vmatpush2.msra.mxu0 0.0
    %329 = vmatprep.subr.mxu0 0.0
    %330 = vmatpush2.msra.mxu0 0.0
    %331 = vmatprep.subr.mxu0 0.0
    %332 = vmatpush2.msra.mxu0 0.0
    %333 = vmatprep.subr.mxu0 0.0
    %334 = vmatpush2.msra.mxu0 0.0
    %335 = vmatprep.subr.mxu0 0.0
    %336 = vmatpush2.msra.mxu0 0.0
    %337 = vmatprep.subr.mxu0 0.0
    %338 = vmatpush2.msra.mxu0 0.0
    %339 = vmatprep.mubr.f32.mxu0 0.0
    %340 = vmatmul.mubr.f32.gmra.mxu0 %v250
    %v341 = vpop.f32.mrf.mxu0
    %v342 = vadd.f32 %v273, %v341
    %v343 = vpop.f32.mrf.mxu0
    %344 = vmatprep.mubr.f32.mxu0 0.0
    %345 = vmatmul.mubr.f32.gmra.mxu0 %v251
    %v346 = vpop.f32.mrf.mxu0
    %v347 = vadd.f32 %v273, %v346
    %v348 = vpop.f32.mrf.mxu0
    %349 = vdwg.mxu0
    %vm350 = vcmask 7168
    %351 = vst.msk [vmem:[%s7] sm:$0xff] %vm350, %v342
    %352 = vst.msk [vmem:[%s7 + $0x8] sm:$0xff] %vm350, %v347
    // Predicated region
    $region38: #{tpu_custom_call.1} parent=1 // pred_check
      _
    $region39: #{tpu_custom_call.1} parent=1 // pred_check_branch
      %354 = sbr.rel (0) target = $region41
    $region40: #{tpu_custom_call.1} parent=1 // pred_region
      _
    $region41: #{tpu_custom_call.1} parent=1 // pred_fallthru
      _
    // Predicated region
    $region42: #{tpu_custom_call.1} parent=1 // pred_check
      _
    $region43: #{tpu_custom_call.1} parent=1 // pred_check_branch
      %356 = sbr.rel (0) target = $region45
    $region44: #{tpu_custom_call.1} parent=1 // pred_region
      _
    $region45: #{tpu_custom_call.1} parent=1 // pred_fallthru
      _
    %357 = vsyncpa [#allocation3], 1
    %358 = vsyncpa [#allocation5], 1

</llo_original>
